<compile_context>
chip_gen: v6e
topology: v6e:2x2x1
jax: 0.10.0
libtpu: 0.0.40
codegen_flags: <defaults>
</compile_context>

<pallas_src>
import functools

import jax
import jax.numpy as jnp
import numpy as np
from jax.experimental import pallas as pl
from jax.experimental.pallas import tpu as pltpu

N_CHANNELS = 44

LOCAL_REGIONS_HGD = {
    1: [0, 1, 2, 6, 7, 8, 9, 13, 14, 15, 19, 20, 21],
    2: [1, 0, 2, 3, 6, 7, 8, 9, 10, 13, 14, 15, 16, 19, 20, 21, 22],
    3: [2, 0, 1, 3, 4, 6, 7, 8, 9, 10, 11, 13, 14, 15, 16, 17, 19, 20, 21, 22, 23],
    4: [3, 1, 2, 4, 5, 7, 8, 9, 10, 11, 12, 14, 15, 16, 17, 18, 20, 21, 22, 23, 24],
    5: [4, 2, 3, 5, 8, 9, 10, 11, 12, 15, 16, 17, 18, 21, 22, 23, 24],
    6: [5, 3, 4, 9, 10, 11, 12, 16, 17, 18, 22, 23, 24],
    7: [6, 0, 1, 2, 7, 8, 9, 13, 14, 15, 19, 20, 21, 25, 26, 27],
    8: [7, 0, 1, 2, 3, 6, 8, 9, 10, 13, 14, 15, 16, 19, 20, 21, 22, 25, 26, 27, 28],
    9: [8, 0, 1, 2, 3, 4, 6, 7, 9, 10, 11, 13, 14, 15, 16, 17, 19, 20, 21, 22, 23, 25, 26, 27, 28, 29],
    10: [9, 0, 1, 2, 3, 4, 5, 6, 7, 8, 10, 11, 12, 13, 14, 15, 16, 17, 18, 19, 20, 21, 22, 23, 24, 25, 26, 27, 28, 29, 30],
    11: [10, 1, 2, 3, 4, 5, 7, 8, 9, 11, 12, 14, 15, 16, 17, 18, 20, 21, 22, 23, 24, 26, 27, 28, 29, 30],
    12: [11, 2, 3, 4, 5, 8, 9, 10, 12, 15, 16, 17, 18, 21, 22, 23, 24, 27, 28, 29, 30],
    13: [12, 3, 4, 5, 9, 10, 11, 16, 17, 18, 22, 23, 24, 28, 29, 30],
    14: [13, 0, 1, 2, 6, 7, 8, 9, 14, 15, 19, 20, 21, 25, 26, 27, 31, 32, 33, 34],
    15: [14, 0, 1, 2, 3, 6, 7, 8, 9, 10, 13, 15, 16, 19, 20, 21, 22, 25, 26, 27, 28, 31, 32, 33, 34, 35],
    16: [15, 0, 1, 2, 3, 4, 6, 7, 8, 9, 10, 11, 13, 14, 16, 17, 19, 20, 21, 22, 23, 25, 26, 27, 28, 29, 31, 32, 33, 34, 35, 36],
    17: [16, 1, 2, 3, 4, 5, 7, 8, 9, 10, 11, 12, 14, 15, 17, 18, 20, 21, 22, 23, 24, 26, 27, 28, 29, 30, 32, 33, 34, 35, 36, 37],
    18: [17, 2, 3, 4, 5, 8, 9, 10, 11, 12, 15, 16, 18, 21, 22, 23, 24, 27, 28, 29, 30, 33, 34, 35, 36, 37],
    19: [18, 3, 4, 5, 9, 10, 11, 12, 16, 17, 22, 23, 24, 28, 29, 30, 34, 35, 36, 37],
    20: [19, 0, 1, 2, 6, 7, 8, 9, 13, 14, 15, 20, 21, 25, 26, 27, 31, 32, 33, 34, 38, 39, 40],
    21: [20, 0, 1, 2, 3, 6, 7, 8, 9, 10, 13, 14, 15, 16, 19, 21, 22, 25, 26, 27, 28, 31, 32, 33, 34, 35, 38, 39, 40, 41],
    22: [21, 0, 1, 2, 3, 4, 6, 7, 8, 9, 10, 11, 13, 14, 15, 16, 17, 19, 20, 22, 23, 25, 26, 27, 28, 29, 31, 32, 33, 34, 35, 36, 38, 39, 40, 41, 42],
    23: [22, 1, 2, 3, 4, 5, 7, 8, 9, 10, 11, 12, 14, 15, 16, 17, 18, 20, 21, 23, 24, 26, 27, 28, 29, 30, 32, 33, 34, 35, 36, 37, 39, 40, 41, 42, 43],
    24: [23, 2, 3, 4, 5, 8, 9, 10, 11, 12, 15, 16, 17, 18, 21, 22, 24, 27, 28, 29, 30, 33, 34, 35, 36, 37, 40, 41, 42, 43],
    25: [24, 3, 4, 5, 9, 10, 11, 12, 16, 17, 18, 22, 23, 28, 29, 30, 34, 35, 36, 37, 41, 42, 43],
    26: [25, 6, 7, 8, 9, 13, 14, 15, 19, 20, 21, 26, 27, 31, 32, 33, 34, 38, 39, 40],
    27: [26, 6, 7, 8, 9, 10, 13, 14, 15, 16, 19, 20, 21, 22, 25, 27, 28, 31, 32, 33, 34, 35, 38, 39, 40, 41],
    28: [27, 6, 7, 8, 9, 10, 11, 13, 14, 15, 16, 17, 19, 20, 21, 22, 23, 25, 26, 28, 29, 31, 32, 33, 34, 35, 36, 38, 39, 40, 41, 42],
    29: [28, 7, 8, 9, 10, 11, 12, 14, 15, 16, 17, 18, 20, 21, 22, 23, 24, 26, 27, 29, 30, 32, 33, 34, 35, 36, 37, 39, 40, 41, 42, 43],
    30: [29, 8, 9, 10, 11, 12, 15, 16, 17, 18, 21, 22, 23, 24, 27, 28, 30, 33, 34, 35, 36, 37, 40, 41, 42, 43],
    31: [30, 9, 10, 11, 12, 16, 17, 18, 22, 23, 24, 28, 29, 34, 35, 36, 37, 41, 42, 43],
    32: [31, 13, 14, 15, 19, 20, 21, 25, 26, 27, 32, 33, 34, 38, 39, 40],
    33: [32, 13, 14, 15, 16, 19, 20, 21, 22, 25, 26, 27, 28, 31, 33, 34, 35, 38, 39, 40, 41],
    34: [33, 13, 14, 15, 16, 17, 19, 20, 21, 22, 23, 25, 26, 27, 28, 29, 31, 32, 34, 35, 36, 38, 39, 40, 41, 42],
    35: [34, 13, 14, 15, 16, 17, 18, 19, 20, 21, 22, 23, 24, 25, 26, 27, 28, 29, 30, 31, 32, 33, 35, 36, 37, 38, 39, 40, 41, 42, 43],
    36: [35, 14, 15, 16, 17, 18, 20, 21, 22, 23, 24, 26, 27, 28, 29, 30, 32, 33, 34, 36, 37, 39, 40, 41, 42, 43],
    37: [36, 15, 16, 17, 18, 21, 22, 23, 24, 27, 28, 29, 30, 33, 34, 35, 37, 40, 41, 42, 43],
    38: [37, 16, 17, 18, 22, 23, 24, 28, 29, 30, 34, 35, 36, 41, 42, 43],
    39: [38, 19, 20, 21, 25, 26, 27, 31, 32, 33, 34, 39, 40],
    40: [39, 19, 20, 21, 22, 25, 26, 27, 28, 31, 32, 33, 34, 35, 38, 40, 41],
    41: [40, 19, 20, 21, 22, 23, 25, 26, 27, 28, 29, 31, 32, 33, 34, 35, 36, 38, 39, 41, 42],
    42: [41, 20, 21, 22, 23, 24, 26, 27, 28, 29, 30, 32, 33, 34, 35, 36, 37, 39, 40, 42, 43],
    43: [42, 21, 22, 23, 24, 27, 28, 29, 30, 33, 34, 35, 36, 37, 40, 41, 43],
    44: [43, 22, 23, 24, 28, 29, 30, 34, 35, 36, 37, 41, 42],
    "all": list(range(44)),
}


def _select_rows_kernel(x_ref, o_ref, *, rows):
    """Copy the statically-selected channel rows of this time tile.

    x_ref: (B, 44, tile_t)   input time tile (channels on the sublane axis)
    o_ref: (B, L,  tile_t)   selected-channel output tile
    """
    # Indices are compile-time constants -> pure static-slice copies, no
    # gather lowering, no MXU, exact (NaN/Inf safe) semantics.
    for j, c in enumerate(rows):
        o_ref[:, j, :] = x_ref[:, c, :]


def _pick_time_tile(t):
    for tt in (512, 256, 128):
        if t % tt == 0:
            return tt
    return t  # full time axis as one lane-dense block


def select_local_region_hgd(x, local_region_id):
    """x: (batch, 1, 44, n_time_samples) -> (batch, 1, L, n_time_samples)."""
    assert x.shape[2] == N_CHANNELS
    rows = tuple(LOCAL_REGIONS_HGD[local_region_id])
    L = len(rows)

    B, _, C, T = x.shape
    x3 = x.reshape(B, C, T)  # free reshape (drops the singleton dim)

    tile_t = _pick_time_tile(T)
    grid = (T // tile_t,)

    out3 = pl.pallas_call(
        functools.partial(_select_rows_kernel, rows=rows),
        out_shape=jax.ShapeDtypeStruct((B, L, T), x.dtype),
        grid=grid,
        in_specs=[pl.BlockSpec((B, C, tile_t), lambda t: (0, 0, t))],
        out_specs=pl.BlockSpec((B, L, tile_t), lambda t: (0, 0, t)),
        compiler_params=pltpu.CompilerParams(
            dimension_semantics=("parallel",)),
    )(x3)

    return out3.reshape(B, 1, L, T)  # free reshape back to NCHW-like layout


if __name__ == "__main__":
    key = jax.random.PRNGKey(0)
    B, T = 2, 256
    x = jax.random.normal(key, (B, 1, N_CHANNELS, T), jnp.float32)

    # Exercise a few region ids (small, large, and 'all').
    for region_id in (1, 10, 22, "all"):
        out = select_local_region_hgd(x, region_id)
        jax.block_until_ready(out)
        idx = np.array(LOCAL_REGIONS_HGD[region_id], dtype=np.int32)
        ref = np.asarray(x)[:, :, idx, :]
        np.testing.assert_array_equal(np.asarray(out), ref)

    print("KERNEL_OK")
</pallas_src>

<mosaic_0001>
module attributes {stable_mosaic.version = 11 : i64} {
  func.func @_select_rows_kernel(%arg0: i32, %arg1: memref<2x44x256xf32, #tpu.memory_space<vmem>>, %arg2: memref<2x13x256xf32, #tpu.memory_space<vmem>>) attributes {dimension_semantics = [#tpu.dimension_semantics<parallel>], iteration_bounds = array<i64: 1>, scalar_prefetch = 0 : i64, scratch_operands = 0 : i64, tpu.core_type = #tpu.core_type<tc>, window_params = [{transform_indices = @transform_0, window_bounds = array<i64: 2, 44, 256>}, {transform_indices = @transform_1, window_bounds = array<i64: 2, 13, 256>}]} {
    %c0 = arith.constant 0 : index
    %c0_0 = arith.constant 0 : index
    %c0_1 = arith.constant 0 : index
    %0 = vector.load %arg1[%c0, %c0_0, %c0_1] : memref<2x44x256xf32, #tpu.memory_space<vmem>>, vector<2x1x256xf32>
    %1 = vector.shape_cast %0 : vector<2x1x256xf32> to vector<2x256xf32>
    %c0_2 = arith.constant 0 : index
    %c0_3 = arith.constant 0 : index
    %c0_4 = arith.constant 0 : index
    %2 = vector.load %arg2[%c0_2, %c0_3, %c0_4] : memref<2x13x256xf32, #tpu.memory_space<vmem>>, vector<2x1x256xf32>
    %3 = vector.shape_cast %2 : vector<2x1x256xf32> to vector<2x256xf32>
    %4 = vector.shape_cast %1 : vector<2x256xf32> to vector<2x1x256xf32>
    tpu.vector_store %arg2[%c0_2, %c0_3, %c0_4], %4 {strides = array<i32>} : memref<2x13x256xf32, #tpu.memory_space<vmem>>, vector<2x1x256xf32>,
    %c0_5 = arith.constant 0 : index
    %c1 = arith.constant 1 : index
    %c0_6 = arith.constant 0 : index
    %5 = vector.load %arg1[%c0_5, %c1, %c0_6] : memref<2x44x256xf32, #tpu.memory_space<vmem>>, vector<2x1x256xf32>
    %6 = vector.shape_cast %5 : vector<2x1x256xf32> to vector<2x256xf32>
    %c0_7 = arith.constant 0 : index
    %c1_8 = arith.constant 1 : index
    %c0_9 = arith.constant 0 : index
    %7 = vector.load %arg2[%c0_7, %c1_8, %c0_9] : memref<2x13x256xf32, #tpu.memory_space<vmem>>, vector<2x1x256xf32>
    %8 = vector.shape_cast %7 : vector<2x1x256xf32> to vector<2x256xf32>
    %9 = vector.shape_cast %6 : vector<2x256xf32> to vector<2x1x256xf32>
    tpu.vector_store %arg2[%c0_7, %c1_8, %c0_9], %9 {strides = array<i32>} : memref<2x13x256xf32, #tpu.memory_space<vmem>>, vector<2x1x256xf32>,
    %c0_10 = arith.constant 0 : index
    %c2 = arith.constant 2 : index
    %c0_11 = arith.constant 0 : index
    %10 = vector.load %arg1[%c0_10, %c2, %c0_11] : memref<2x44x256xf32, #tpu.memory_space<vmem>>, vector<2x1x256xf32>
    %11 = vector.shape_cast %10 : vector<2x1x256xf32> to vector<2x256xf32>
    %c0_12 = arith.constant 0 : index
    %c2_13 = arith.constant 2 : index
    %c0_14 = arith.constant 0 : index
    %12 = vector.load %arg2[%c0_12, %c2_13, %c0_14] : memref<2x13x256xf32, #tpu.memory_space<vmem>>, vector<2x1x256xf32>
    %13 = vector.shape_cast %12 : vector<2x1x256xf32> to vector<2x256xf32>
    %14 = vector.shape_cast %11 : vector<2x256xf32> to vector<2x1x256xf32>
    tpu.vector_store %arg2[%c0_12, %c2_13, %c0_14], %14 {strides = array<i32>} : memref<2x13x256xf32, #tpu.memory_space<vmem>>, vector<2x1x256xf32>,
    %c0_15 = arith.constant 0 : index
    %c6 = arith.constant 6 : index
    %c0_16 = arith.constant 0 : index
    %15 = vector.load %arg1[%c0_15, %c6, %c0_16] : memref<2x44x256xf32, #tpu.memory_space<vmem>>, vector<2x1x256xf32>
    %16 = vector.shape_cast %15 : vector<2x1x256xf32> to vector<2x256xf32>
    %c0_17 = arith.constant 0 : index
    %c3 = arith.constant 3 : index
    %c0_18 = arith.constant 0 : index
    %17 = vector.load %arg2[%c0_17, %c3, %c0_18] : memref<2x13x256xf32, #tpu.memory_space<vmem>>, vector<2x1x256xf32>
    %18 = vector.shape_cast %17 : vector<2x1x256xf32> to vector<2x256xf32>
    %19 = vector.shape_cast %16 : vector<2x256xf32> to vector<2x1x256xf32>
    tpu.vector_store %arg2[%c0_17, %c3, %c0_18], %19 {strides = array<i32>} : memref<2x13x256xf32, #tpu.memory_space<vmem>>, vector<2x1x256xf32>,
    %c0_19 = arith.constant 0 : index
    %c7 = arith.constant 7 : index
    %c0_20 = arith.constant 0 : index
    %20 = vector.load %arg1[%c0_19, %c7, %c0_20] : memref<2x44x256xf32, #tpu.memory_space<vmem>>, vector<2x1x256xf32>
    %21 = vector.shape_cast %20 : vector<2x1x256xf32> to vector<2x256xf32>
    %c0_21 = arith.constant 0 : index
    %c4 = arith.constant 4 : index
    %c0_22 = arith.constant 0 : index
    %22 = vector.load %arg2[%c0_21, %c4, %c0_22] : memref<2x13x256xf32, #tpu.memory_space<vmem>>, vector<2x1x256xf32>
    %23 = vector.shape_cast %22 : vector<2x1x256xf32> to vector<2x256xf32>
    %24 = vector.shape_cast %21 : vector<2x256xf32> to vector<2x1x256xf32>
    tpu.vector_store %arg2[%c0_21, %c4, %c0_22], %24 {strides = array<i32>} : memref<2x13x256xf32, #tpu.memory_space<vmem>>, vector<2x1x256xf32>,
    %c0_23 = arith.constant 0 : index
    %c8 = arith.constant 8 : index
    %c0_24 = arith.constant 0 : index
    %25 = vector.load %arg1[%c0_23, %c8, %c0_24] : memref<2x44x256xf32, #tpu.memory_space<vmem>>, vector<2x1x256xf32>
    %26 = vector.shape_cast %25 : vector<2x1x256xf32> to vector<2x256xf32>
    %c0_25 = arith.constant 0 : index
    %c5 = arith.constant 5 : index
    %c0_26 = arith.constant 0 : index
    %27 = vector.load %arg2[%c0_25, %c5, %c0_26] : memref<2x13x256xf32, #tpu.memory_space<vmem>>, vector<2x1x256xf32>
    %28 = vector.shape_cast %27 : vector<2x1x256xf32> to vector<2x256xf32>
    %29 = vector.shape_cast %26 : vector<2x256xf32> to vector<2x1x256xf32>
    tpu.vector_store %arg2[%c0_25, %c5, %c0_26], %29 {strides = array<i32>} : memref<2x13x256xf32, #tpu.memory_space<vmem>>, vector<2x1x256xf32>,
    %c0_27 = arith.constant 0 : index
    %c9 = arith.constant 9 : index
    %c0_28 = arith.constant 0 : index
    %30 = vector.load %arg1[%c0_27, %c9, %c0_28] : memref<2x44x256xf32, #tpu.memory_space<vmem>>, vector<2x1x256xf32>
    %31 = vector.shape_cast %30 : vector<2x1x256xf32> to vector<2x256xf32>
    %c0_29 = arith.constant 0 : index
    %c6_30 = arith.constant 6 : index
    %c0_31 = arith.constant 0 : index
    %32 = vector.load %arg2[%c0_29, %c6_30, %c0_31] : memref<2x13x256xf32, #tpu.memory_space<vmem>>, vector<2x1x256xf32>
    %33 = vector.shape_cast %32 : vector<2x1x256xf32> to vector<2x256xf32>
    %34 = vector.shape_cast %31 : vector<2x256xf32> to vector<2x1x256xf32>
    tpu.vector_store %arg2[%c0_29, %c6_30, %c0_31], %34 {strides = array<i32>} : memref<2x13x256xf32, #tpu.memory_space<vmem>>, vector<2x1x256xf32>,
    %c0_32 = arith.constant 0 : index
    %c13 = arith.constant 13 : index
    %c0_33 = arith.constant 0 : index
    %35 = vector.load %arg1[%c0_32, %c13, %c0_33] : memref<2x44x256xf32, #tpu.memory_space<vmem>>, vector<2x1x256xf32>
    %36 = vector.shape_cast %35 : vector<2x1x256xf32> to vector<2x256xf32>
    %c0_34 = arith.constant 0 : index
    %c7_35 = arith.constant 7 : index
    %c0_36 = arith.constant 0 : index
    %37 = vector.load %arg2[%c0_34, %c7_35, %c0_36] : memref<2x13x256xf32, #tpu.memory_space<vmem>>, vector<2x1x256xf32>
    %38 = vector.shape_cast %37 : vector<2x1x256xf32> to vector<2x256xf32>
    %39 = vector.shape_cast %36 : vector<2x256xf32> to vector<2x1x256xf32>
    tpu.vector_store %arg2[%c0_34, %c7_35, %c0_36], %39 {strides = array<i32>} : memref<2x13x256xf32, #tpu.memory_space<vmem>>, vector<2x1x256xf32>,
    %c0_37 = arith.constant 0 : index
    %c14 = arith.constant 14 : index
    %c0_38 = arith.constant 0 : index
    %40 = vector.load %arg1[%c0_37, %c14, %c0_38] : memref<2x44x256xf32, #tpu.memory_space<vmem>>, vector<2x1x256xf32>
    %41 = vector.shape_cast %40 : vector<2x1x256xf32> to vector<2x256xf32>
    %c0_39 = arith.constant 0 : index
    %c8_40 = arith.constant 8 : index
    %c0_41 = arith.constant 0 : index
    %42 = vector.load %arg2[%c0_39, %c8_40, %c0_41] : memref<2x13x256xf32, #tpu.memory_space<vmem>>, vector<2x1x256xf32>
    %43 = vector.shape_cast %42 : vector<2x1x256xf32> to vector<2x256xf32>
    %44 = vector.shape_cast %41 : vector<2x256xf32> to vector<2x1x256xf32>
    tpu.vector_store %arg2[%c0_39, %c8_40, %c0_41], %44 {strides = array<i32>} : memref<2x13x256xf32, #tpu.memory_space<vmem>>, vector<2x1x256xf32>,
    %c0_42 = arith.constant 0 : index
    %c15 = arith.constant 15 : index
    %c0_43 = arith.constant 0 : index
    %45 = vector.load %arg1[%c0_42, %c15, %c0_43] : memref<2x44x256xf32, #tpu.memory_space<vmem>>, vector<2x1x256xf32>
    %46 = vector.shape_cast %45 : vector<2x1x256xf32> to vector<2x256xf32>
    %c0_44 = arith.constant 0 : index
    %c9_45 = arith.constant 9 : index
    %c0_46 = arith.constant 0 : index
    %47 = vector.load %arg2[%c0_44, %c9_45, %c0_46] : memref<2x13x256xf32, #tpu.memory_space<vmem>>, vector<2x1x256xf32>
    %48 = vector.shape_cast %47 : vector<2x1x256xf32> to vector<2x256xf32>
    %49 = vector.shape_cast %46 : vector<2x256xf32> to vector<2x1x256xf32>
    tpu.vector_store %arg2[%c0_44, %c9_45, %c0_46], %49 {strides = array<i32>} : memref<2x13x256xf32, #tpu.memory_space<vmem>>, vector<2x1x256xf32>,
    %c0_47 = arith.constant 0 : index
    %c19 = arith.constant 19 : index
    %c0_48 = arith.constant 0 : index
    %50 = vector.load %arg1[%c0_47, %c19, %c0_48] : memref<2x44x256xf32, #tpu.memory_space<vmem>>, vector<2x1x256xf32>
    %51 = vector.shape_cast %50 : vector<2x1x256xf32> to vector<2x256xf32>
    %c0_49 = arith.constant 0 : index
    %c10 = arith.constant 10 : index
    %c0_50 = arith.constant 0 : index
    %52 = vector.load %arg2[%c0_49, %c10, %c0_50] : memref<2x13x256xf32, #tpu.memory_space<vmem>>, vector<2x1x256xf32>
    %53 = vector.shape_cast %52 : vector<2x1x256xf32> to vector<2x256xf32>
    %54 = vector.shape_cast %51 : vector<2x256xf32> to vector<2x1x256xf32>
    tpu.vector_store %arg2[%c0_49, %c10, %c0_50], %54 {strides = array<i32>} : memref<2x13x256xf32, #tpu.memory_space<vmem>>, vector<2x1x256xf32>,
    %c0_51 = arith.constant 0 : index
    %c20 = arith.constant 20 : index
    %c0_52 = arith.constant 0 : index
    %55 = vector.load %arg1[%c0_51, %c20, %c0_52] : memref<2x44x256xf32, #tpu.memory_space<vmem>>, vector<2x1x256xf32>
    %56 = vector.shape_cast %55 : vector<2x1x256xf32> to vector<2x256xf32>
    %c0_53 = arith.constant 0 : index
    %c11 = arith.constant 11 : index
    %c0_54 = arith.constant 0 : index
    %57 = vector.load %arg2[%c0_53, %c11, %c0_54] : memref<2x13x256xf32, #tpu.memory_space<vmem>>, vector<2x1x256xf32>
    %58 = vector.shape_cast %57 : vector<2x1x256xf32> to vector<2x256xf32>
    %59 = vector.shape_cast %56 : vector<2x256xf32> to vector<2x1x256xf32>
    tpu.vector_store %arg2[%c0_53, %c11, %c0_54], %59 {strides = array<i32>} : memref<2x13x256xf32, #tpu.memory_space<vmem>>, vector<2x1x256xf32>,
    %c0_55 = arith.constant 0 : index
    %c21 = arith.constant 21 : index
    %c0_56 = arith.constant 0 : index
    %60 = vector.load %arg1[%c0_55, %c21, %c0_56] : memref<2x44x256xf32, #tpu.memory_space<vmem>>, vector<2x1x256xf32>
    %61 = vector.shape_cast %60 : vector<2x1x256xf32> to vector<2x256xf32>
    %c0_57 = arith.constant 0 : index
    %c12 = arith.constant 12 : index
    %c0_58 = arith.constant 0 : index
    %62 = vector.load %arg2[%c0_57, %c12, %c0_58] : memref<2x13x256xf32, #tpu.memory_space<vmem>>, vector<2x1x256xf32>
    %63 = vector.shape_cast %62 : vector<2x1x256xf32> to vector<2x256xf32>
    %64 = vector.shape_cast %61 : vector<2x256xf32> to vector<2x1x256xf32>
    tpu.vector_store %arg2[%c0_57, %c12, %c0_58], %64 {strides = array<i32>} : memref<2x13x256xf32, #tpu.memory_space<vmem>>, vector<2x1x256xf32>,
    return
  }
  func.func @transform_0(%arg0: i32) -> (i32, i32, i32) {
    %c0_i32 = arith.constant 0 : i32
    %c0_i32_0 = arith.constant 0 : i32
    %c0_i32_1 = arith.constant 0 : i32
    return %c0_i32, %c0_i32_0, %arg0 : i32, i32, i32
  }
  func.func @transform_1(%arg0: i32) -> (i32, i32, i32) {
    %c0_i32 = arith.constant 0 : i32
    %c0_i32_0 = arith.constant 0 : i32
    %c0_i32_1 = arith.constant 0 : i32
    return %c0_i32, %c0_i32_0, %arg0 : i32, i32, i32
  }
}

</mosaic_0001>

<llo_original>
// kernel: tpu_custom_call.1
$region0: #{tpu_custom_call.1}
  #allocation0 [shape = 'u32[]', space=smem, size = 0x4, offset = 0x4, fixed_abs, tag = 'smem constant byte address 0x4 - core index']
  #allocation1 [shape = 'u32[144,128]{1,0:T(1,128)}', space=vmem, size = 0x12000, scoped, tag = 'internal scratch']
  %s0 = inlined_call_operand.vmem [shape: f32[2,44,256], index: 0, kind: input, shape index: {}]
  %s1 = inlined_call_operand.vmem [shape: f32[2,13,256], index: 1, kind: output, shape index: {}]
  %s2 = sld [smem:[#allocation0]]
  $region14: #{tpu_custom_call.1} parent=0
    _
  %s4 = ssub.s32 1, %s2
  %s5 = scalar_select 0, %s4, %s2
  // Predicated region
  $region2: #{tpu_custom_call.1} parent=0 // pred_check
    _
  $region3: #{tpu_custom_call.1} parent=0 // pred_check_branch
    %7 = sbr.rel (0) target = $region5
  $region4: #{tpu_custom_call.1} parent=0 // pred_region
    _
  $region5: #{tpu_custom_call.1} parent=0 // pred_fallthru
    _
  %v8 = vld [vmem:[%s0] ss:$8 sm:$0x3]
  %s9 = scalar_lea.vmem %s0, 96
  %v10 = vld [vmem:[%s9] ss:$8 sm:$0x3]
  %v11 = vlaneseq
  %vm12 = vcmp.ge.s32.totalorder %v11, 0
  %vm13 = vcmp.lt.s32.totalorder %v11, 256
  %vm14 = vmand %vm12, %vm13
  %15 = vst.msk [vmem:[%s1] ss:$8 sm:$0x3] %vm14, %v8
  %16 = vst.msk [vmem:[%s1] ss:$8 sm:$0x0] %vm14, %v8
  %s17 = scalar_lea.vmem %s1, 32
  %18 = vst.msk [vmem:[%s17] ss:$8 sm:$0x3] %vm14, %v10
  %19 = vst.msk [vmem:[%s17] ss:$8 sm:$0x0] %vm14, %v10
  %s20 = scalar_lea.vmem %s0, 1
  %v21 = vld [vmem:[%s20] ss:$8 sm:$0x3]
  %s22 = scalar_lea.vmem %s0, 97
  %v23 = vld [vmem:[%s22] ss:$8 sm:$0x3]
  %s24 = scalar_lea.vmem %s1, 1
  %25 = vst.msk [vmem:[%s24] ss:$8 sm:$0x3] %vm14, %v21
  %26 = vst.msk [vmem:[%s24] ss:$8 sm:$0x0] %vm14, %v21
  %s27 = scalar_lea.vmem %s1, 33
  %28 = vst.msk [vmem:[%s27] ss:$8 sm:$0x3] %vm14, %v23
  %29 = vst.msk [vmem:[%s27] ss:$8 sm:$0x0] %vm14, %v23
  %s30 = scalar_lea.vmem %s0, 2
  %v31 = vld [vmem:[%s30] ss:$8 sm:$0x3]
  %s32 = scalar_lea.vmem %s0, 98
  %v33 = vld [vmem:[%s32] ss:$8 sm:$0x3]
  %s34 = scalar_lea.vmem %s1, 2
  %35 = vst.msk [vmem:[%s34] ss:$8 sm:$0x3] %vm14, %v31
  %36 = vst.msk [vmem:[%s34] ss:$8 sm:$0x0] %vm14, %v31
  %s37 = scalar_lea.vmem %s1, 34
  %38 = vst.msk [vmem:[%s37] ss:$8 sm:$0x3] %vm14, %v33
  %39 = vst.msk [vmem:[%s37] ss:$8 sm:$0x0] %vm14, %v33
  %s40 = scalar_lea.vmem %s0, 6
  %v41 = vld [vmem:[%s40] ss:$8 sm:$0x3]
  %s42 = scalar_lea.vmem %s0, 102
  %v43 = vld [vmem:[%s42] ss:$8 sm:$0x3]
  %s44 = scalar_lea.vmem %s1, 3
  %45 = vst.msk [vmem:[%s44] ss:$8 sm:$0x3] %vm14, %v41
  %46 = vst.msk [vmem:[%s44] ss:$8 sm:$0x0] %vm14, %v41
  %s47 = scalar_lea.vmem %s1, 35
  %48 = vst.msk [vmem:[%s47] ss:$8 sm:$0x3] %vm14, %v43
  %49 = vst.msk [vmem:[%s47] ss:$8 sm:$0x0] %vm14, %v43
  %s50 = scalar_lea.vmem %s0, 7
  %v51 = vld [vmem:[%s50] ss:$8 sm:$0x3]
  %s52 = scalar_lea.vmem %s0, 103
  %v53 = vld [vmem:[%s52] ss:$8 sm:$0x3]
  %s54 = scalar_lea.vmem %s1, 4
  %55 = vst.msk [vmem:[%s54] ss:$8 sm:$0x3] %vm14, %v51
  %56 = vst.msk [vmem:[%s54] ss:$8 sm:$0x0] %vm14, %v51
  %s57 = scalar_lea.vmem %s1, 36
  %58 = vst.msk [vmem:[%s57] ss:$8 sm:$0x3] %vm14, %v53
  %59 = vst.msk [vmem:[%s57] ss:$8 sm:$0x0] %vm14, %v53
  %s60 = scalar_lea.vmem %s0, 16
  %v61 = vld [vmem:[%s60] ss:$8 sm:$0x3]
  %s62 = scalar_lea.vmem %s0, 112
  %v63 = vld [vmem:[%s62] ss:$8 sm:$0x3]
  %s64 = scalar_lea.vmem %s1, 5
  %65 = vst.msk [vmem:[%s64] ss:$8 sm:$0x3] %vm14, %v61
  %66 = vst.msk [vmem:[%s64] ss:$8 sm:$0x0] %vm14, %v61
  %s67 = scalar_lea.vmem %s1, 37
  %68 = vst.msk [vmem:[%s67] ss:$8 sm:$0x3] %vm14, %v63
  %69 = vst.msk [vmem:[%s67] ss:$8 sm:$0x0] %vm14, %v63
  %s70 = scalar_lea.vmem %s0, 17
  %v71 = vld [vmem:[%s70] ss:$8 sm:$0x3]
  %s72 = scalar_lea.vmem %s0, 113
  %v73 = vld [vmem:[%s72] ss:$8 sm:$0x3]
  %s74 = scalar_lea.vmem %s1, 6
  %75 = vst.msk [vmem:[%s74] ss:$8 sm:$0x3] %vm14, %v71
  %76 = vst.msk [vmem:[%s74] ss:$8 sm:$0x0] %vm14, %v71
  %s77 = scalar_lea.vmem %s1, 38
  %78 = vst.msk [vmem:[%s77] ss:$8 sm:$0x3] %vm14, %v73
  %79 = vst.msk [vmem:[%s77] ss:$8 sm:$0x0] %vm14, %v73
  %s80 = scalar_lea.vmem %s0, 21
  %v81 = vld [vmem:[%s80] ss:$8 sm:$0x3]
  %s82 = scalar_lea.vmem %s0, 117
  %v83 = vld [vmem:[%s82] ss:$8 sm:$0x3]
  %s84 = scalar_lea.vmem %s1, 7
  %85 = vst.msk [vmem:[%s84] ss:$8 sm:$0x3] %vm14, %v81
  %86 = vst.msk [vmem:[%s84] ss:$8 sm:$0x0] %vm14, %v81
  %s87 = scalar_lea.vmem %s1, 39
  %88 = vst.msk [vmem:[%s87] ss:$8 sm:$0x3] %vm14, %v83
  %89 = vst.msk [vmem:[%s87] ss:$8 sm:$0x0] %vm14, %v83
  %s90 = scalar_lea.vmem %s0, 22
  %v91 = vld [vmem:[%s90] ss:$8 sm:$0x3]
  %s92 = scalar_lea.vmem %s0, 118
  %v93 = vld [vmem:[%s92] ss:$8 sm:$0x3]
  %s94 = scalar_lea.vmem %s1, 16
  %95 = vst.msk [vmem:[%s94] ss:$8 sm:$0x3] %vm14, %v91
  %96 = vst.msk [vmem:[%s94] ss:$8 sm:$0x0] %vm14, %v91
  %s97 = scalar_lea.vmem %s1, 48
  %98 = vst.msk [vmem:[%s97] ss:$8 sm:$0x3] %vm14, %v93
  %99 = vst.msk [vmem:[%s97] ss:$8 sm:$0x0] %vm14, %v93
  %s100 = scalar_lea.vmem %s0, 23
  %v101 = vld [vmem:[%s100] ss:$8 sm:$0x3]
  %s102 = scalar_lea.vmem %s0, 119
  %v103 = vld [vmem:[%s102] ss:$8 sm:$0x3]
  %s104 = scalar_lea.vmem %s1, 17
  %105 = vst.msk [vmem:[%s104] ss:$8 sm:$0x3] %vm14, %v101
  %106 = vst.msk [vmem:[%s104] ss:$8 sm:$0x0] %vm14, %v101
  %s107 = scalar_lea.vmem %s1, 49
  %108 = vst.msk [vmem:[%s107] ss:$8 sm:$0x3] %vm14, %v103
  %109 = vst.msk [vmem:[%s107] ss:$8 sm:$0x0] %vm14, %v103
  %s110 = scalar_lea.vmem %s0, 35
  %v111 = vld [vmem:[%s110] ss:$8 sm:$0x3]
  %s112 = scalar_lea.vmem %s0, 131
  %v113 = vld [vmem:[%s112] ss:$8 sm:$0x3]
  %s114 = scalar_lea.vmem %s1, 18
  %115 = vst.msk [vmem:[%s114] ss:$8 sm:$0x3] %vm14, %v111
  %116 = vst.msk [vmem:[%s114] ss:$8 sm:$0x0] %vm14, %v111
  %s117 = scalar_lea.vmem %s1, 50
  %118 = vst.msk [vmem:[%s117] ss:$8 sm:$0x3] %vm14, %v113
  %119 = vst.msk [vmem:[%s117] ss:$8 sm:$0x0] %vm14, %v113
  %s120 = scalar_lea.vmem %s0, 36
  %v121 = vld [vmem:[%s120] ss:$8 sm:$0x3]
  %s122 = scalar_lea.vmem %s0, 132
  %v123 = vld [vmem:[%s122] ss:$8 sm:$0x3]
  %s124 = scalar_lea.vmem %s1, 19
  %125 = vst.msk [vmem:[%s124] ss:$8 sm:$0x3] %vm14, %v121
  %126 = vst.msk [vmem:[%s124] ss:$8 sm:$0x0] %vm14, %v121
  %s127 = scalar_lea.vmem %s1, 51
  %128 = vst.msk [vmem:[%s127] ss:$8 sm:$0x3] %vm14, %v123
  %129 = vst.msk [vmem:[%s127] ss:$8 sm:$0x0] %vm14, %v123
  %s130 = scalar_lea.vmem %s0, 37
  %v131 = vld [vmem:[%s130] ss:$8 sm:$0x3]
  %s132 = scalar_lea.vmem %s0, 133
  %v133 = vld [vmem:[%s132] ss:$8 sm:$0x3]
  %s134 = scalar_lea.vmem %s1, 20
  %135 = vst.msk [vmem:[%s134] ss:$8 sm:$0x3] %vm14, %v131
  %136 = vst.msk [vmem:[%s134] ss:$8 sm:$0x0] %vm14, %v131
  %s137 = scalar_lea.vmem %s1, 52
  %138 = vst.msk [vmem:[%s137] ss:$8 sm:$0x3] %vm14, %v133
  %139 = vst.msk [vmem:[%s137] ss:$8 sm:$0x0] %vm14, %v133
  // Predicated region
  $region6: #{tpu_custom_call.1} parent=0 // pred_check
    _
  $region7: #{tpu_custom_call.1} parent=0 // pred_check_branch
    %141 = sbr.rel (0) target = $region9
  $region8: #{tpu_custom_call.1} parent=0 // pred_region
    _
  $region9: #{tpu_custom_call.1} parent=0 // pred_fallthru
    _
  // Predicated region
  $region10: #{tpu_custom_call.1} parent=0 // pred_check
    _
  $region11: #{tpu_custom_call.1} parent=0 // pred_check_branch
    %143 = sbr.rel (0) target = $region13
  $region12: #{tpu_custom_call.1} parent=0 // pred_region
    _
  $region13: #{tpu_custom_call.1} parent=0 // pred_fallthru
    _

</llo_original>
